<compile_context>
chip_gen: v7x
topology: tpu7x:2x2x1
jax: 0.10.0
libtpu: 0.0.40
codegen_flags: <defaults>
</compile_context>

<pallas_src>
import jax
import jax.numpy as jnp
from jax.experimental import pallas as pl
from jax.experimental.pallas import tpu as pltpu


# Rows (of 128 lanes each) per grid step.  3 MiB f32 payload per block;
# in+out double-buffered = 12 MiB, inside v5e's 16 MiB default scoped VMEM.
TILE_R = 2048


def _lorenz63_kernel(params_ref, state_ref, out_ref):
    # params live in SMEM (scalar prefetch): cheap scalar reads, broadcast
    # over the VPU tiles.
    rho = params_ref[0]    # params[..., 0]
    sigma = params_ref[1]  # params[..., 1]
    beta = params_ref[2]   # params[..., 2]

    # SoA block: axis 0 = component (x, y, z), each a dense (TILE_R, 128) slab.
    # Compute in f32 regardless of the (possibly narrow) HBM dtype.
    x = state_ref[0].astype(jnp.float32)
    y = state_ref[1].astype(jnp.float32)
    z = state_ref[2].astype(jnp.float32)

    out_dtype = out_ref.dtype
    out_ref[0] = (sigma * (y - x)).astype(out_dtype)
    out_ref[1] = (x * (rho - z) - y).astype(out_dtype)
    out_ref[2] = (x * y - beta * z).astype(out_dtype)


def lorenz63_field_soa(params, state_soa, *, tile_r=TILE_R):
    """Lorenz-63 vector field on a (3, R, 128) SoA state.

    This is the zero-copy entry point: no transposes, no padding.  Integrators
    should keep their state in this layout across steps.

    params:    (3,) -> (rho, sigma, beta)
    state_soa: (3, R, 128), any float dtype (kept in HBM as-is)
    returns:   (3, R, 128) vector field, same dtype as `state_soa`.
    """
    three, r, lanes = state_soa.shape
    assert three == 3 and lanes == 128, "state_soa must be (3, R, 128)"

    # If the whole array fits in one block, use the exact extent (always a
    # legal block shape); otherwise use the MiB-scale tile (multiple of 8)
    # and let Pallas mask the ragged last block.
    tr = r if r <= tile_r else tile_r
    num_tiles = pl.cdiv(r, tr)

    itemsize = jnp.dtype(state_soa.dtype).itemsize
    n_elem = 3 * r * 128

    return pl.pallas_call(
        _lorenz63_kernel,
        out_shape=jax.ShapeDtypeStruct((3, r, 128), state_soa.dtype),
        grid_spec=pltpu.PrefetchScalarGridSpec(
            num_scalar_prefetch=1,                       # params -> SMEM
            grid=(num_tiles,),
            in_specs=[pl.BlockSpec((3, tr, 128), lambda i, p: (0, i, 0))],
            out_specs=pl.BlockSpec((3, tr, 128), lambda i, p: (0, i, 0)),
        ),
        compiler_params=pltpu.CompilerParams(
            dimension_semantics=("parallel",),           # megacore on v7x
        ),
        cost_estimate=pl.CostEstimate(
            flops=8 * (r * 128),
            transcendentals=0,
            bytes_accessed=2 * n_elem * itemsize),
    )(params.astype(jnp.float32), state_soa)


def lorenz63_forward(params, state, *, tile_r=TILE_R):
    """PyTorch-compatible Pallas equivalent of Lorenz63.forward(t, state).

    params: (3,)      -> (rho, sigma, beta)
    state:  (..., 3)  any float dtype
    returns the vector field with the same shape/dtype as `state`.

    Note: the AoS<->SoA transpose (and the <=127-element lane pad) here are
    pure HBM traffic around a memory-bound kernel; callers that integrate in
    a loop should use `lorenz63_field_soa` on a persistent (3, R, 128) state.
    """
    orig_shape = state.shape
    flat = state.reshape(-1, 3)                      # (N, 3) AoS, keep dtype
    n = flat.shape[0]

    r = pl.cdiv(max(n, 1), 128)                      # rows of 128 lanes
    pad = r * 128 - n

    soa = flat.T                                     # (3, N) SoA
    if pad:
        soa = jnp.pad(soa, ((0, 0), (0, pad)))       # pad only to lane width
    soa = soa.reshape(3, r, 128)

    out_soa = lorenz63_field_soa(params, soa, tile_r=tile_r)

    out = out_soa.reshape(3, r * 128)[:, :n].T.reshape(orig_shape)
    return out


def _reference_forward(params, state):
    """Plain-JAX reference (mirrors the PyTorch forward) for validation."""
    x = state[..., 0]
    y = state[..., 1]
    z = state[..., 2]
    f0 = params[1] * (y - x)
    f1 = x * (params[0] - z) - y
    f2 = x * y - params[2] * z
    return jnp.stack([f0, f1, f2], axis=-1)


if __name__ == "__main__":
    key = jax.random.PRNGKey(0)

    # Deterministic module parameters: classic Lorenz-63 values.
    # params layout: (rho, sigma, beta) matching params[..., 0/1/2] usage.
    params = jnp.asarray([28.0, 10.0, 8.0 / 3.0], dtype=jnp.float32)

    # Batch of states with leading dims, last dim = 3 (x, y, z).
    state = jax.random.normal(key, (4, 8, 3), dtype=jnp.float32) * 5.0

    out = lorenz63_forward(params, state)
    out = jax.block_until_ready(out)

    ref = _reference_forward(params, state)
    assert out.shape == state.shape and out.dtype == state.dtype
    assert jnp.allclose(out, ref, atol=1e-5, rtol=1e-5), "mismatch vs reference"

    # Also exercise the zero-copy SoA path directly.
    soa_state = jax.random.normal(key, (3, 16, 128), dtype=jnp.float32) * 5.0
    soa_out = jax.block_until_ready(lorenz63_field_soa(params, soa_state))
    soa_ref = _reference_forward(
        params, jnp.moveaxis(soa_state, 0, -1))
    assert jnp.allclose(jnp.moveaxis(soa_out, 0, -1), soa_ref,
                        atol=1e-5, rtol=1e-5), "SoA path mismatch"

    # TODO(synk): g()/jacobian() are trivial host-side helpers (ones_like
    # scale, 3x3 numpy jacobian) and not worth a Pallas kernel.  If this field
    # feeds an ODE/SDE integrator, fuse the Euler/RK stage update into
    # `lorenz63_field_soa` and keep the state resident in (3, R, 128) layout
    # to eliminate all wrapper HBM passes.
    print("KERNEL_OK")
</pallas_src>

<mosaic_0001>
module attributes {stable_mosaic.version = 11 : i64} {
  func.func @_lorenz63_kernel(%arg0: i32, %arg1: memref<3xf32, #tpu.memory_space<smem>>, %arg2: memref<3x1x128xf32, #tpu.memory_space<vmem>>, %arg3: memref<3x1x128xf32, #tpu.memory_space<vmem>>) attributes {dimension_semantics = [#tpu.dimension_semantics<parallel>], iteration_bounds = array<i64: 1>, scalar_prefetch = 1 : i64, scratch_operands = 0 : i64, tpu.core_type = #tpu.core_type<tc>, window_params = [{transform_indices = @transform_0, window_bounds = array<i64: 3, 1, 128>}, {transform_indices = @transform_1, window_bounds = array<i64: 3, 1, 128>}]} {
    %c0 = arith.constant 0 : index
    %0 = memref.load %arg1[%c0] : memref<3xf32, #tpu.memory_space<smem>>
    %c1 = arith.constant 1 : index
    %1 = memref.load %arg1[%c1] : memref<3xf32, #tpu.memory_space<smem>>
    %c2 = arith.constant 2 : index
    %2 = memref.load %arg1[%c2] : memref<3xf32, #tpu.memory_space<smem>>
    %c0_0 = arith.constant 0 : index
    %c0_1 = arith.constant 0 : index
    %c0_2 = arith.constant 0 : index
    %3 = vector.load %arg2[%c0_0, %c0_1, %c0_2] : memref<3x1x128xf32, #tpu.memory_space<vmem>>, vector<1x1x128xf32>
    %4 = vector.shape_cast %3 : vector<1x1x128xf32> to vector<1x128xf32>
    %c1_3 = arith.constant 1 : index
    %c0_4 = arith.constant 0 : index
    %c0_5 = arith.constant 0 : index
    %5 = vector.load %arg2[%c1_3, %c0_4, %c0_5] : memref<3x1x128xf32, #tpu.memory_space<vmem>>, vector<1x1x128xf32>
    %6 = vector.shape_cast %5 : vector<1x1x128xf32> to vector<1x128xf32>
    %c2_6 = arith.constant 2 : index
    %c0_7 = arith.constant 0 : index
    %c0_8 = arith.constant 0 : index
    %7 = vector.load %arg2[%c2_6, %c0_7, %c0_8] : memref<3x1x128xf32, #tpu.memory_space<vmem>>, vector<1x1x128xf32>
    %8 = vector.shape_cast %7 : vector<1x1x128xf32> to vector<1x128xf32>
    %9 = arith.subf %6, %4 : vector<1x128xf32>
    %10 = vector.broadcast %1 : f32 to vector<1x128xf32>
    %11 = arith.mulf %10, %9 : vector<1x128xf32>
    %c0_9 = arith.constant 0 : index
    %c0_10 = arith.constant 0 : index
    %c0_11 = arith.constant 0 : index
    %12 = vector.load %arg3[%c0_9, %c0_10, %c0_11] : memref<3x1x128xf32, #tpu.memory_space<vmem>>, vector<1x1x128xf32>
    %13 = vector.shape_cast %12 : vector<1x1x128xf32> to vector<1x128xf32>
    %14 = vector.shape_cast %11 : vector<1x128xf32> to vector<1x1x128xf32>
    tpu.vector_store %arg3[%c0_9, %c0_10, %c0_11], %14 {strides = array<i32>} : memref<3x1x128xf32, #tpu.memory_space<vmem>>, vector<1x1x128xf32>,
    %15 = vector.broadcast %0 : f32 to vector<1x128xf32>
    %16 = arith.subf %15, %8 : vector<1x128xf32>
    %17 = arith.mulf %4, %16 : vector<1x128xf32>
    %18 = arith.subf %17, %6 : vector<1x128xf32>
    %c1_12 = arith.constant 1 : index
    %c0_13 = arith.constant 0 : index
    %c0_14 = arith.constant 0 : index
    %19 = vector.load %arg3[%c1_12, %c0_13, %c0_14] : memref<3x1x128xf32, #tpu.memory_space<vmem>>, vector<1x1x128xf32>
    %20 = vector.shape_cast %19 : vector<1x1x128xf32> to vector<1x128xf32>
    %21 = vector.shape_cast %18 : vector<1x128xf32> to vector<1x1x128xf32>
    tpu.vector_store %arg3[%c1_12, %c0_13, %c0_14], %21 {strides = array<i32>} : memref<3x1x128xf32, #tpu.memory_space<vmem>>, vector<1x1x128xf32>,
    %22 = arith.mulf %4, %6 : vector<1x128xf32>
    %23 = vector.broadcast %2 : f32 to vector<1x128xf32>
    %24 = arith.mulf %23, %8 : vector<1x128xf32>
    %25 = arith.subf %22, %24 : vector<1x128xf32>
    %c2_15 = arith.constant 2 : index
    %c0_16 = arith.constant 0 : index
    %c0_17 = arith.constant 0 : index
    %26 = vector.load %arg3[%c2_15, %c0_16, %c0_17] : memref<3x1x128xf32, #tpu.memory_space<vmem>>, vector<1x1x128xf32>
    %27 = vector.shape_cast %26 : vector<1x1x128xf32> to vector<1x128xf32>
    %28 = vector.shape_cast %25 : vector<1x128xf32> to vector<1x1x128xf32>
    tpu.vector_store %arg3[%c2_15, %c0_16, %c0_17], %28 {strides = array<i32>} : memref<3x1x128xf32, #tpu.memory_space<vmem>>, vector<1x1x128xf32>,
    return
  }
  func.func @transform_0(%arg0: i32, %arg1: memref<3xf32, #tpu.memory_space<smem>>) -> (i32, i32, i32) {
    %c0_i32 = arith.constant 0 : i32
    %c0_i32_0 = arith.constant 0 : i32
    %c0_i32_1 = arith.constant 0 : i32
    return %c0_i32, %arg0, %c0_i32_0 : i32, i32, i32
  }
  func.func @transform_1(%arg0: i32, %arg1: memref<3xf32, #tpu.memory_space<smem>>) -> (i32, i32, i32) {
    %c0_i32 = arith.constant 0 : i32
    %c0_i32_0 = arith.constant 0 : i32
    %c0_i32_1 = arith.constant 0 : i32
    return %c0_i32, %arg0, %c0_i32_0 : i32, i32, i32
  }
}

</mosaic_0001>

<llo_original>
// kernel: tpu_custom_call.1
$region0: #{tpu_custom_call.1}
  #allocation0 [shape = 'u32[]', space=smem, size = 0x4, offset = 0x4, fixed_abs, tag = 'smem constant byte address 0x4 - core index']
  #allocation1 [shape = 'u32[144,128]{1,0:T(1,128)}', space=vmem, size = 0x12000, scoped, tag = 'internal scratch']
  #allocation2 [shape = 's32[1]{0}', space=sflag, size = 0x4, scoped, tag = 'scoped memory for tpu_custom_call.1']
  #allocation3 [shape = 'u8[512]{0}', space=smem, size = 0x200, scoped, tag = 'prefetched SMEM operand 0']
  %s0 = inlined_call_operand.hbm [shape: f32[3], index: 0, kind: input, shape index: {}]
  %s1 = inlined_call_operand.vmem [shape: f32[3,1,128], index: 1, kind: input, shape index: {}]
  %s2 = inlined_call_operand.hbm [shape: f32[3,1,128], index: 2, kind: output, shape index: {}]
  %s3 = sld [smem:[#allocation0]]
  $region14: #{tpu_custom_call.1} parent=0
    _
  %s5 = ssub.s32 1, %s3
  %s6 = scalar_select 0, %s5, %s3
  %8 = dma.hbm_to_smem %s0, 16, [#allocation3], [#allocation2]
  %9 = dma.done [#allocation2], 16
  %10 = sfence
  $region1: #{tpu_custom_call.1} parent=0
    #allocation4 [shape = 'u8[1536]{0}', space=vmem, size = 0x800, scoped, tag = 'output window, operand 0, single buffered']
    #allocation5 [shape = 's32[1]{0}', space=sflag, size = 0x4, scoped, tag = 'scoped memory for tpu_custom_call.1']
    %11 = vsyncpa [#allocation5], 0
    // Predicated region
    $region2: #{tpu_custom_call.1} parent=1 // pred_check
      _
    $region3: #{tpu_custom_call.1} parent=1 // pred_check_branch
      %13 = sbr.rel (0) target = $region5
    $region4: #{tpu_custom_call.1} parent=1 // pred_region
      _
    $region5: #{tpu_custom_call.1} parent=1 // pred_fallthru
      _
    %s14 = sld [smem:[#allocation3]]
    %s15 = sld [smem:[#allocation3 + $0x1]]
    %s16 = sld [smem:[#allocation3 + $0x2]]
    %v17 = vld [vmem:[%s1] sm:$0x1]
    %s18 = scalar_lea.vmem %s1, 1
    %v19 = vld [vmem:[%s18] sm:$0x1]
    %s20 = scalar_lea.vmem %s1, 2
    %v21 = vld [vmem:[%s20] sm:$0x1]
    %v22 = vsub.f32 %v19, %v17
    %v23 = vstv %s15
    %v24 = vmul.f32 %v23, %v22
    %25 = vst [vmem:[#allocation4] sm:$0x1] %v24
    %v26 = vstv %s14
    %v27 = vsub.f32 %v26, %v21
    %v28 = vmul.f32 %v17, %v27
    %v29 = vsub.f32 %v28, %v19
    %s30 = scalar_lea.vmem [#allocation4], 1
    %31 = vst [vmem:[%s30] sm:$0x1] %v29
    %v32 = vmul.f32 %v17, %v19
    %v33 = vstv %s16
    %v34 = vmul.f32 %v33, %v21
    %v35 = vsub.f32 %v32, %v34
    %s36 = scalar_lea.vmem [#allocation4], 2
    %37 = vst [vmem:[%s36] sm:$0x1] %v35
    // Predicated region
    $region6: #{tpu_custom_call.1} parent=1 // pred_check
      _
    $region7: #{tpu_custom_call.1} parent=1 // pred_check_branch
      %39 = sbr.rel (0) target = $region9
    $region8: #{tpu_custom_call.1} parent=1 // pred_region
      %s41 = ssub.s32 48, 48
      %42 = vsyncadd [#allocation5], %s41
      %s43 = sshll.u32 [#allocation4], 4
      %s44 = int_to_ptr.vmem [resolvable:$true] %s43
      %49 = dma.vmem_to_hbm [thread:$0]  %s44, 48, %s2, [#allocation5], 16, 16, 1
    $region9: #{tpu_custom_call.1} parent=1 // pred_fallthru
      _
    // Predicated region
    $region10: #{tpu_custom_call.1} parent=1 // pred_check
      _
    $region11: #{tpu_custom_call.1} parent=1 // pred_check_branch
      %51 = sbr.rel (0) target = $region13
    $region12: #{tpu_custom_call.1} parent=1 // pred_region
      %52 = dma.done [#allocation5], 48
    $region13: #{tpu_custom_call.1} parent=1 // pred_fallthru
      _
    %53 = vsyncpa [#allocation5], 1

</llo_original>
